<compile_context>
chip_gen: v7x
topology: tpu7x:2x2x1
jax: 0.10.0
libtpu: 0.0.40
codegen_flags: <defaults>
</compile_context>

<pallas_src>
import functools

import jax
import jax.numpy as jnp
from jax.experimental import pallas as pl
from jax.experimental.pallas import tpu as pltpu
import numpy as np


# ---------------------------------------------------------------------------
# Kernel 1: squeeze (global average pool over H, W) + excitation (FC-ReLU-FC-sigmoid)
# ---------------------------------------------------------------------------
def _se_squeeze_excite_kernel(x_ref, w1_ref, w2_ref, g_ref, acc_ref, *, inv_hw):
    """Grid: (N, H // TH).  The H-tile axis is a reduction (last, "arbitrary").

    x_ref  : (1, TH, W, C)  NHWC input tile (C on lanes, W on sublanes)
    w1_ref : (C, Cr)        fc1 weight, pre-transposed to (in, out)
    w2_ref : (Cr, C)        fc2 weight, pre-transposed to (in, out)
    g_ref  : (1, 1, C)      output: sigmoid gate per (batch, channel)
    acc_ref: (1, C) f32     VMEM scratch: running channel sum across row tiles
    """
    t = pl.program_id(1)

    @pl.when(t == 0)
    def _init():
        acc_ref[...] = jnp.zeros_like(acc_ref)

    # Partial channel sum of this row tile (lane axis C stays dense).
    acc_ref[...] += jnp.sum(x_ref[...].astype(jnp.float32), axis=(1, 2))

    @pl.when(t == pl.num_programs(1) - 1)
    def _finalize():
        mean = acc_ref[...] * inv_hw                                    # (1, C)
        h = jnp.dot(mean, w1_ref[...].astype(jnp.float32),
                    preferred_element_type=jnp.float32)                 # (1, Cr)
        h = jnp.maximum(h, 0.0)                                         # ReLU
        z = jnp.dot(h, w2_ref[...].astype(jnp.float32),
                    preferred_element_type=jnp.float32)                 # (1, C)
        g = jax.nn.sigmoid(z)                                           # EUP
        g_ref[...] = g.reshape(g_ref.shape).astype(g_ref.dtype)


# ---------------------------------------------------------------------------
# Kernel 2: scale the input feature map by the per-channel gates
# ---------------------------------------------------------------------------
def _se_scale_kernel(x_ref, g_ref, o_ref):
    """Grid: (N, H // TH), both axes parallel.

    x_ref: (1, TH, W, C);  g_ref: (1, 1, C);  o_ref: (1, TH, W, C)
    """
    # Lane-aligned broadcast of the (C,) gate across sublanes / rows (pure VPU).
    o_ref[...] = (x_ref[...] * g_ref[...].astype(x_ref.dtype)).astype(o_ref.dtype)


# ---------------------------------------------------------------------------
# Wrapper
# ---------------------------------------------------------------------------
def _pick_row_tile(h, row_bytes, budget_bytes=2 << 20):
    """Largest multiple-of-8 divisor of h whose tile fits the byte budget."""
    cands = [d for d in range(8, h + 1, 8) if h % d == 0]
    if not cands:
        return h  # tiny / odd H: take all rows
    max_rows = max(8, budget_bytes // max(1, row_bytes))
    fitting = [d for d in cands if d <= max_rows]
    return max(fitting) if fitting else min(cands)


def se_block(x_nchw, w_fc1, w_fc2):
    """SEBlock forward (PyTorch semantics, no biases).

    x_nchw: (N, C, H, W)
    w_fc1 : (C//r, C)   torch Linear weight (out_features, in_features)
    w_fc2 : (C, C//r)
    returns (N, C, H, W) = x * sigmoid(fc2(relu(fc1(avgpool(x)))))
    """
    N, C, H, W = x_nchw.shape
    Cr = w_fc1.shape[0]
    dt = x_nchw.dtype

    # Glue: NCHW -> NHWC (channels on lanes); torch (out,in) weights -> (in,out).
    x = jnp.transpose(x_nchw, (0, 2, 3, 1))                    # (N, H, W, C)
    w1t = jnp.transpose(w_fc1, (1, 0)).astype(jnp.float32)     # (C, Cr)
    w2t = jnp.transpose(w_fc2, (1, 0)).astype(jnp.float32)     # (Cr, C)

    itemsize = jnp.dtype(dt).itemsize
    TH = _pick_row_tile(H, W * C * itemsize)
    n_ht = H // TH
    tile_bytes = TH * W * C * itemsize
    # ~ 2x double-buffered input + 2x output tiles + weights/gates/scratch + headroom,
    # capped below v7x's 64 MiB physical VMEM.
    vmem_limit = int(min(48 << 20,
                         max(16 << 20,
                             4 * tile_bytes + 4 * (C * Cr + 2 * C) * 4 + (2 << 20))))

    # ---- pass 1: squeeze + excitation -> per-(n, c) gates -----------------
    gates = pl.pallas_call(
        functools.partial(_se_squeeze_excite_kernel, inv_hw=1.0 / float(H * W)),
        out_shape=jax.ShapeDtypeStruct((N, 1, C), jnp.float32),
        grid_spec=pltpu.PrefetchScalarGridSpec(
            num_scalar_prefetch=0,
            grid=(N, n_ht),
            in_specs=[
                pl.BlockSpec((1, TH, W, C), lambda n, t: (n, t, 0, 0)),
                pl.BlockSpec((C, Cr), lambda n, t: (0, 0)),
                pl.BlockSpec((Cr, C), lambda n, t: (0, 0)),
            ],
            out_specs=pl.BlockSpec((1, 1, C), lambda n, t: (n, 0, 0)),
            scratch_shapes=[pltpu.VMEM((1, C), jnp.float32)],
        ),
        compiler_params=pltpu.CompilerParams(
            dimension_semantics=("parallel", "arbitrary"),
            vmem_limit_bytes=vmem_limit),
    )(x, w1t, w2t)

    # ---- pass 2: broadcast-scale x by the gates ----------------------------
    out_nhwc = pl.pallas_call(
        _se_scale_kernel,
        out_shape=jax.ShapeDtypeStruct((N, H, W, C), dt),
        grid_spec=pltpu.PrefetchScalarGridSpec(
            num_scalar_prefetch=0,
            grid=(N, n_ht),
            in_specs=[
                pl.BlockSpec((1, TH, W, C), lambda n, t: (n, t, 0, 0)),
                pl.BlockSpec((1, 1, C), lambda n, t: (n, 0, 0)),
            ],
            out_specs=pl.BlockSpec((1, TH, W, C), lambda n, t: (n, t, 0, 0)),
        ),
        compiler_params=pltpu.CompilerParams(
            dimension_semantics=("parallel", "parallel"),
            vmem_limit_bytes=vmem_limit),
    )(x, gates)

    return jnp.transpose(out_nhwc, (0, 3, 1, 2))               # back to NCHW


# ---------------------------------------------------------------------------
# Pure-JAX reference (mirrors the PyTorch SEBlock forward)
# ---------------------------------------------------------------------------
def _reference(x, w_fc1, w_fc2):
    y = jnp.mean(x, axis=(2, 3))                  # (N, C) global average pool
    h = jnp.maximum(y @ w_fc1.T, 0.0)             # Linear (no bias) + ReLU
    g = jax.nn.sigmoid(h @ w_fc2.T)               # Linear (no bias) + Sigmoid
    return x * g[:, :, None, None]


if __name__ == "__main__":
    # Module default reduction=16 -> choose C=128 so the hidden width is 8 and
    # the channel (lane) dimension is dense (multiple of 128).
    N, C, H, W, RED = 2, 128, 16, 16, 16
    Cr = C // RED

    key = jax.random.PRNGKey(0)
    kx, k1, k2 = jax.random.split(key, 3)
    x = jax.random.normal(kx, (N, C, H, W), dtype=jnp.float32)
    w_fc1 = jax.random.normal(k1, (Cr, C), dtype=jnp.float32) * 0.1   # fc1 weight
    w_fc2 = jax.random.normal(k2, (C, Cr), dtype=jnp.float32) * 0.1   # fc2 weight

    out = jax.block_until_ready(se_block(x, w_fc1, w_fc2))
    ref = jax.block_until_ready(_reference(x, w_fc1, w_fc2))
    np.testing.assert_allclose(np.asarray(out), np.asarray(ref), atol=1e-5, rtol=1e-5)

    print("KERNEL_OK")
</pallas_src>

<mosaic_0001>
module attributes {stable_mosaic.version = 11 : i64} {
  func.func @_se_squeeze_excite_kernel(%arg0: i32, %arg1: i32, %arg2: memref<1x16x16x128xf32, #tpu.memory_space<vmem>>, %arg3: memref<128x8xf32, #tpu.memory_space<vmem>>, %arg4: memref<8x128xf32, #tpu.memory_space<vmem>>, %arg5: memref<1x1x128xf32, #tpu.memory_space<vmem>>, %arg6: memref<1x128xf32, #tpu.memory_space<vmem>>) attributes {dimension_semantics = [#tpu.dimension_semantics<parallel>, #tpu.dimension_semantics<arbitrary>], iteration_bounds = array<i64: 2, 1>, scalar_prefetch = 0 : i64, scratch_operands = 1 : i64, tpu.core_type = #tpu.core_type<tc>, window_params = [{transform_indices = @transform_0, window_bounds = array<i64: 1, 16, 16, 128>}, {pipeline_mode = #tpu.pipeline_mode<synchronous>, transform_indices = @transform_1, window_bounds = array<i64: 128, 8>}, {pipeline_mode = #tpu.pipeline_mode<synchronous>, transform_indices = @transform_2, window_bounds = array<i64: 8, 128>}, {transform_indices = @transform_3, window_bounds = array<i64: 1, 1, 128>}]} {
    %c0_i32 = arith.constant 0 : i32
    %0 = arith.cmpi eq, %arg1, %c0_i32 : i32
    %1 = arith.extui %0 : i1 to i32
    %c0_i32_0 = arith.constant 0 : i32
    %2 = arith.cmpi ne, %1, %c0_i32_0 : i32
    scf.if %2 {
      %cst_10 = arith.constant 0.000000e+00 : f32
      %11 = vector.broadcast %cst_10 : f32 to vector<1x128xf32>
      %c0_11 = arith.constant 0 : index
      %c0_12 = arith.constant 0 : index
      %12 = vector.load %arg6[%c0_11, %c0_12] : memref<1x128xf32, #tpu.memory_space<vmem>>, vector<1x128xf32>
      tpu.vector_store %arg6[%c0_11, %c0_12], %11 {strides = array<i32>} : memref<1x128xf32, #tpu.memory_space<vmem>>, vector<1x128xf32>,
    } else {
    }
    %c0 = arith.constant 0 : index
    %c0_1 = arith.constant 0 : index
    %3 = vector.load %arg6[%c0, %c0_1] : memref<1x128xf32, #tpu.memory_space<vmem>>, vector<1x128xf32>
    %c0_2 = arith.constant 0 : index
    %c0_3 = arith.constant 0 : index
    %c0_4 = arith.constant 0 : index
    %c0_5 = arith.constant 0 : index
    %4 = vector.load %arg2[%c0_2, %c0_3, %c0_4, %c0_5] : memref<1x16x16x128xf32, #tpu.memory_space<vmem>>, vector<1x16x16x128xf32>
    %cst = arith.constant dense<0.000000e+00> : vector<1x128xf32>
    %5 = vector.multi_reduction <add>, %4, %cst [1, 2] : vector<1x16x16x128xf32> to vector<1x128xf32>
    %6 = arith.addf %3, %5 : vector<1x128xf32>
    %c0_6 = arith.constant 0 : index
    %c0_7 = arith.constant 0 : index
    %7 = vector.load %arg6[%c0_6, %c0_7] : memref<1x128xf32, #tpu.memory_space<vmem>>, vector<1x128xf32>
    tpu.vector_store %arg6[%c0_6, %c0_7], %6 {strides = array<i32>} : memref<1x128xf32, #tpu.memory_space<vmem>>, vector<1x128xf32>,
    %c0_i32_8 = arith.constant 0 : i32
    %8 = arith.cmpi eq, %arg1, %c0_i32_8 : i32
    %9 = arith.extui %8 : i1 to i32
    %c0_i32_9 = arith.constant 0 : i32
    %10 = arith.cmpi ne, %9, %c0_i32_9 : i32
    scf.if %10 {
      %c0_10 = arith.constant 0 : index
      %c0_11 = arith.constant 0 : index
      %11 = vector.load %arg6[%c0_10, %c0_11] : memref<1x128xf32, #tpu.memory_space<vmem>>, vector<1x128xf32>
      %cst_12 = arith.constant 3.906250e-03 : f32
      %12 = vector.broadcast %cst_12 : f32 to vector<1x128xf32>
      %13 = arith.mulf %11, %12 : vector<1x128xf32>
      %c0_13 = arith.constant 0 : index
      %c0_14 = arith.constant 0 : index
      %14 = vector.load %arg3[%c0_13, %c0_14] : memref<128x8xf32, #tpu.memory_space<vmem>>, vector<128x8xf32>
      %cst_15 = arith.constant dense<0.000000e+00> : vector<1x8xf32>
      %15 = tpu.matmul %13, %14, %cst_15 {dimension_numbers = #tpu.dot_dimension_numbers<[1], [0], [0], [1], [0, 0, 1, 1], [], []>} : vector<1x128xf32>, vector<128x8xf32>, vector<1x8xf32> -> vector<1x8xf32>
      %cst_16 = arith.constant 0.000000e+00 : f32
      %16 = vector.broadcast %cst_16 : f32 to vector<1x8xf32>
      %17 = arith.maximumf %15, %16 : vector<1x8xf32>
      %c0_17 = arith.constant 0 : index
      %c0_18 = arith.constant 0 : index
      %18 = vector.load %arg4[%c0_17, %c0_18] : memref<8x128xf32, #tpu.memory_space<vmem>>, vector<8x128xf32>
      %cst_19 = arith.constant dense<0.000000e+00> : vector<1x128xf32>
      %19 = tpu.matmul %17, %18, %cst_19 {dimension_numbers = #tpu.dot_dimension_numbers<[1], [0], [0], [1], [0, 0, 1, 1], [], []>} : vector<1x8xf32>, vector<8x128xf32>, vector<1x128xf32> -> vector<1x128xf32>
      %20 = arith.negf %19 : vector<1x128xf32>
      %21 = math.exp %20 : vector<1x128xf32>
      %cst_20 = arith.constant 1.000000e+00 : f32
      %22 = vector.broadcast %cst_20 : f32 to vector<1x128xf32>
      %23 = arith.addf %22, %21 : vector<1x128xf32>
      %24 = arith.divf %22, %23 : vector<1x128xf32>
      %25 = vector.shape_cast %24 : vector<1x128xf32> to vector<1x1x128xf32>
      %c0_21 = arith.constant 0 : index
      %c0_22 = arith.constant 0 : index
      %c0_23 = arith.constant 0 : index
      %26 = vector.load %arg5[%c0_21, %c0_22, %c0_23] : memref<1x1x128xf32, #tpu.memory_space<vmem>>, vector<1x1x128xf32>
      tpu.vector_store %arg5[%c0_21, %c0_22, %c0_23], %25 {strides = array<i32>} : memref<1x1x128xf32, #tpu.memory_space<vmem>>, vector<1x1x128xf32>,
    } else {
    }
    return
  }
  func.func @transform_0(%arg0: i32, %arg1: i32) -> (i32, i32, i32, i32) {
    %c0_i32 = arith.constant 0 : i32
    %c0_i32_0 = arith.constant 0 : i32
    %c0_i32_1 = arith.constant 0 : i32
    return %arg0, %arg1, %c0_i32, %c0_i32_0 : i32, i32, i32, i32
  }
  func.func @transform_1(%arg0: i32, %arg1: i32) -> (i32, i32) {
    %c0_i32 = arith.constant 0 : i32
    %c0_i32_0 = arith.constant 0 : i32
    %c0_i32_1 = arith.constant 0 : i32
    return %c0_i32, %c0_i32_0 : i32, i32
  }
  func.func @transform_2(%arg0: i32, %arg1: i32) -> (i32, i32) {
    %c0_i32 = arith.constant 0 : i32
    %c0_i32_0 = arith.constant 0 : i32
    %c0_i32_1 = arith.constant 0 : i32
    return %c0_i32, %c0_i32_0 : i32, i32
  }
  func.func @transform_3(%arg0: i32, %arg1: i32) -> (i32, i32, i32) {
    %c0_i32 = arith.constant 0 : i32
    %c0_i32_0 = arith.constant 0 : i32
    %c0_i32_1 = arith.constant 0 : i32
    return %arg0, %c0_i32, %c0_i32_0 : i32, i32, i32
  }
}

</mosaic_0001>

<llo_original>
// kernel: tpu_custom_call.1
$region0: #{tpu_custom_call.1}
  #allocation0 [shape = 'u32[]', space=smem, size = 0x4, offset = 0x4, fixed_abs, tag = 'smem constant byte address 0x4 - core index']
  #allocation1 [shape = 'u32[144,128]{1,0:T(1,128)}', space=vmem, size = 0x12000, scoped, tag = 'internal scratch']
  #allocation2 [shape = 'f32[1,128]{1,0:T(1,128)}', space=vmem, size = 0x200, scoped, tag = 'scratch operand']
  %s0 = inlined_call_operand.hbm [shape: f32[2,16,16,128], index: 0, kind: input, shape index: {}]
  %s1 = inlined_call_operand.vmem [shape: f32[128,8], index: 1, kind: input, shape index: {}]
  %s2 = inlined_call_operand.vmem [shape: f32[8,128], index: 2, kind: input, shape index: {}]
  %s3 = inlined_call_operand.hbm [shape: f32[2,1,128], index: 3, kind: output, shape index: {}]
  %s4 = sld [smem:[#allocation0]]
  $region57: #{tpu_custom_call.1} parent=0
    _
  %s6 = ssub.s32 1, %s4
  %s7 = scalar_select 0, %s6, %s4
  $region1: #{tpu_custom_call.1} parent=0
    #allocation3 [shape = 'u8[262144]{0}', space=vmem, size = 0x40000, scoped, tag = 'input window, operand 0']
    #allocation4 [shape = 's32[2]{0}', space=sflag, size = 0x8, scoped, tag = 'scoped memory for tpu_custom_call.1']
    #allocation5 [shape = 's32[2]{0}', space=sflag, size = 0x8, scoped, tag = 'scoped memory for tpu_custom_call.1']
    #allocation6 [shape = 'u8[1024]{0}', space=vmem, size = 0x400, scoped, tag = 'output window, operand 0']
    %8 = vsyncpa [#allocation4], 0
    %s9 = scalar_lea.sflag [#allocation4], 1
    %10 = vsyncpa %s9, 0
    %11 = vsyncpa [#allocation5], 0
    %s12 = scalar_lea.sflag [#allocation5], 1
    %13 = vsyncpa %s12, 0
    loop: start=0, step=1, limit=4
    $region2: #{tpu_custom_call.1} parent=1 // loop_pre_header
      _
    $region3: #{tpu_custom_call.1} parent=1 // loop_header
      %s15 = sphi 0, %s19
      %p16 = scmp.ge.s32.totalorder %s15, 4
      %s22 = sphi 0, %s34
      %s23 = sphi 0, %s30
      %s24 = sphi 0, %s22
      %s25 = sphi 0, %s23
      %s26 = sphi 0, %s24
      %s27 = sphi 0, %s25
      %s39 = sphi 0, %s41
      %s42 = sphi 0, %s39
      %s43 = sphi 0, %s42
      %s59 = sphi 0, %s43
      %s63 = sphi 0, %s63
      %s65 = sphi 0, %s63
      %s66 = sphi 0, %s65
      %s80 = sphi 0, %s66
      %s84 = sphi 0, %s84
      %s86 = sphi 0, %s84
      %s87 = sphi 0, %s86
      %s101 = sphi 0, %s87
      %s107 = sphi 0, %s109
      %s110 = sphi 0, %s107
      %s111 = sphi 0, %s110
      %s127 = sphi 0, %s111
    $region4: #{tpu_custom_call.1} parent=1 // loop_header_branch
      %18 = sbr.rel (%p16) target = $region8
    $region5: #{tpu_custom_call.1} parent=1 // loop_body
      %s20 = ssub.s32 %s15, 1
      %s21 = ssub.s32 %s15, 2
      %s28 = sadd.s32 1, %s23
      %p29 = scmp.ge.s32.totalorder %s28, 1
      %s30 = scalar_select %p29, 0, %s28
      %s31 = sadd.s32 1, %s22
      %s32 = scalar_select %p29, %s31, %s22
      %p33 = scmp.ge.s32.totalorder %s32, 2
      %s34 = scalar_select %p33, 0, %s32
      %s35 = ssub.s32 %s22, %s34
      %s36 = ssub.s32 %s23, %s30
      %s37 = sor.u32 %s35, %s36
      %p38 = scmp.eq.s32.totalorder %s37, 0
      %s40 = sadd.s32 %s39, 1
      %s41 = scalar_select %p38, %s39, %s40
      %p44 = pneg %p38
      %p45 = scmp.eq.s32.totalorder %s15, 1
      %p46 = por %p44, %p45
      %p47 = scmp.ne.s32.totalorder %s39, %s42
      %p48 = scmp.eq.s32.totalorder %s15, 0
      %p49 = por %p47, %p48
      %p50 = scmp.ne.s32.totalorder %s39, %s42
      %p51 = scmp.eq.s32.totalorder %s20, 1
      %p52 = por %p50, %p51
      %p53 = scmp.ne.s32.totalorder %s42, %s43
      %p54 = scmp.eq.s32.totalorder %s20, 0
      %p55 = por %p53, %p54
      %p56 = scmp.ne.s32.totalorder %s42, %s43
      %p57 = scmp.eq.s32.totalorder %s21, 1
      %p58 = por %p56, %p57
      %p60 = scmp.ne.s32.totalorder %s43, %s59
      %p61 = scmp.eq.s32.totalorder %s21, 0
      %p62 = por %p60, %p61
      %s64 = sadd.s32 %s63, 1
      %p67 = scmp.eq.s32.totalorder %s15, 1
      %p68 = scmp.ne.s32.totalorder %s63, %s65
      %p69 = scmp.eq.s32.totalorder %s15, 0
      %p70 = por %p68, %p69
      %p71 = scmp.ne.s32.totalorder %s63, %s65
      %p72 = scmp.eq.s32.totalorder %s20, 1
      %p73 = por %p71, %p72
      %p74 = scmp.ne.s32.totalorder %s65, %s66
      %p75 = scmp.eq.s32.totalorder %s20, 0
      %p76 = por %p74, %p75
      %p77 = scmp.ne.s32.totalorder %s65, %s66
      %p78 = scmp.eq.s32.totalorder %s21, 1
      %p79 = por %p77, %p78
      %p81 = scmp.ne.s32.totalorder %s66, %s80
      %p82 = scmp.eq.s32.totalorder %s21, 0
      %p83 = por %p81, %p82
      %s85 = sadd.s32 %s84, 1
      %p88 = scmp.eq.s32.totalorder %s15, 1
      %p89 = scmp.ne.s32.totalorder %s84, %s86
      %p90 = scmp.eq.s32.totalorder %s15, 0
      %p91 = por %p89, %p90
      %p92 = scmp.ne.s32.totalorder %s84, %s86
      %p93 = scmp.eq.s32.totalorder %s20, 1
      %p94 = por %p92, %p93
      %p95 = scmp.ne.s32.totalorder %s86, %s87
      %p96 = scmp.eq.s32.totalorder %s20, 0
      %p97 = por %p95, %p96
      %p98 = scmp.ne.s32.totalorder %s86, %s87
      %p99 = scmp.eq.s32.totalorder %s21, 1
      %p100 = por %p98, %p99
      %p102 = scmp.ne.s32.totalorder %s87, %s101
      %p103 = scmp.eq.s32.totalorder %s21, 0
      %p104 = por %p102, %p103
      %s105 = ssub.s32 %s22, %s34
      %p106 = scmp.eq.s32.totalorder %s105, 0
      %s108 = sadd.s32 %s107, 1
      %s109 = scalar_select %p106, %s107, %s108
      %p112 = pneg %p106
      %p113 = scmp.eq.s32.totalorder %s15, 1
      %p114 = por %p112, %p113
      %p115 = scmp.ne.s32.totalorder %s107, %s110
      %p116 = scmp.eq.s32.totalorder %s15, 0
      %p117 = por %p115, %p116
      %p118 = scmp.ne.s32.totalorder %s107, %s110
      %p119 = scmp.eq.s32.totalorder %s20, 1
      %p120 = por %p118, %p119
      %p121 = scmp.ne.s32.totalorder %s110, %s111
      %p122 = scmp.eq.s32.totalorder %s20, 0
      %p123 = por %p121, %p122
      %p124 = scmp.ne.s32.totalorder %s110, %s111
      %p125 = scmp.eq.s32.totalorder %s21, 1
      %p126 = por %p124, %p125
      %p128 = scmp.ne.s32.totalorder %s111, %s127
      %p129 = scmp.eq.s32.totalorder %s21, 0
      %p130 = por %p128, %p129
      %p131 = scmp.le.s32.totalorder 1, %s15
      %p132 = scmp.lt.s32.totalorder %s15, 3
      %p133 = pnand %p131, %p132
      %p134 = pneg %p133
      // Predicated region
      $region9: #{tpu_custom_call.1} parent=5 // pred_check
        _
      $region10: #{tpu_custom_call.1} parent=5 // pred_check_branch
        %136 = sbr.rel (%p133) target = $region12
      $region11: #{tpu_custom_call.1} parent=5 // pred_region
        %s137 = ssub.s32 %s15, 1
        // Predicated region
        $region13: #{tpu_custom_call.1} parent=11 // pred_check
          %p138 = pneg %p76
        $region14: #{tpu_custom_call.1} parent=11 // pred_check_branch
          %140 = sbr.rel (%p138) target = $region16
        $region15: #{tpu_custom_call.1} parent=11 // pred_region
          _
        $region16: #{tpu_custom_call.1} parent=11 // pred_fallthru
          _
        // Predicated region
        $region17: #{tpu_custom_call.1} parent=11 // pred_check
          %p141 = pneg %p97
        $region18: #{tpu_custom_call.1} parent=11 // pred_check_branch
          %143 = sbr.rel (%p141) target = $region20
        $region19: #{tpu_custom_call.1} parent=11 // pred_region
          _
        $region20: #{tpu_custom_call.1} parent=11 // pred_fallthru
          _
      $region12: #{tpu_custom_call.1} parent=5 // pred_fallthru
        _
      %p144 = scmp.lt.s32.totalorder %s15, 2
      // Predicated region
      $region21: #{tpu_custom_call.1} parent=5 // pred_check
        %p145 = pneg %p144
      $region22: #{tpu_custom_call.1} parent=5 // pred_check_branch
        %147 = sbr.rel (%p145) target = $region24
      $region23: #{tpu_custom_call.1} parent=5 // pred_region
        // Predicated region
        $region25: #{tpu_custom_call.1} parent=23 // pred_check
          %p148 = pneg %p49
        $region26: #{tpu_custom_call.1} parent=23 // pred_check_branch
          %150 = sbr.rel (%p148) target = $region28
        $region27: #{tpu_custom_call.1} parent=23 // pred_region
          %s151 = sand.u32 %s39, 1
          %s152 = scalar_lea.sflag [#allocation4], %s151
          %s153 = sand.u32 %s39, 1
          %s154 = smul.addr %s153, 256
          %s155 = scalar_lea.vmem [#allocation3], %s154
          %s156 = smul.u32 16, %s23
          %s158 = ssub.s32 4096, 4096
          %159 = vsyncadd %s152, %s158
          %s160 = smul.addr %s156, 2
          %s161 = smul.addr %s22, 32
          %s162 = sadd.s32 %s160, %s161
          %s163 = smul.addr %s162, 128
          %s164 = scalar_lea.hbm %s0, %s163
          %s165 = sshll.u32 %s155, 4
          %s166 = int_to_ptr.vmem [resolvable:$true] %s165
          %171 = dma.hbm_to_vmem [thread:$0]  %s164, 4096, %s166, %s152, 128, 128, 8
        $region28: #{tpu_custom_call.1} parent=23 // pred_fallthru
          _
      $region24: #{tpu_custom_call.1} parent=5 // pred_fallthru
        _
      %p172 = scmp.le.s32.totalorder 1, %s15
      %p173 = scmp.lt.s32.totalorder %s15, 3
      %p174 = pnand %p172, %p173
      %p175 = pneg %p174
      // Predicated region
      $region29: #{tpu_custom_call.1} parent=5 // pred_check
        _
      $region30: #{tpu_custom_call.1} parent=5 // pred_check_branch
        %177 = sbr.rel (%p174) target = $region32
      $region31: #{tpu_custom_call.1} parent=5 // pred_region
        %s178 = ssub.s32 %s15, 1
        %s179 = sand.u32 %s42, 1
        %s180 = scalar_lea.sflag [#allocation4], %s179
        %s181 = sand.u32 %s42, 1
        %s182 = smul.addr %s181, 256
        %s183 = scalar_lea.vmem [#allocation3], %s182
        // Predicated region
        $region33: #{tpu_custom_call.1} parent=31 // pred_check
          %p184 = pneg %p55
        $region34: #{tpu_custom_call.1} parent=31 // pred_check_branch
          %186 = sbr.rel (%p184) target = $region36
        $region35: #{tpu_custom_call.1} parent=31 // pred_region
          %187 = dma.done %s180, 4096
        $region36: #{tpu_custom_call.1} parent=31 // pred_fallthru
          _
        %s188 = sand.u32 %s42, 1
        %s189 = scalar_lea.sflag [#allocation4], %s188
        %s190 = sand.u32 %s42, 1
        %s191 = smul.addr %s190, 256
        %s192 = scalar_lea.vmem [#allocation3], %s191
        %p193 = pneg %p55
        %p194 = pneg %p52
        %p195 = pneg %p76
        %p196 = pneg %p73
        %p197 = pneg %p97
        %p198 = pneg %p94
        %p199 = pneg %p123
        %p200 = pneg %p120
        %s201 = sand.u32 %s110, 1
        %s202 = scalar_lea.sflag [#allocation5], %s201
        %s203 = sand.u32 %s110, 1
        %s204 = scalar_lea.vmem [#allocation6], %s203
        %s205 = smul.u32 16, %s25
        %p206 = scmp.eq.s32.totalorder %s25, 0
        // Predicated region
        $region37: #{tpu_custom_call.1} parent=31 // pred_check
          %p207 = pneg %p206
        $region38: #{tpu_custom_call.1} parent=31 // pred_check_branch
          %209 = sbr.rel (%p207) target = $region40
        $region39: #{tpu_custom_call.1} parent=31 // pred_region
          %210 = vst [vmem:[#allocation2] sm:$0x1] 0.0
        $region40: #{tpu_custom_call.1} parent=31 // pred_fallthru
          _
        %v211 = vld [vmem:[#allocation2] sm:$0x1]
        %v212 = vld [vmem:[%s183] sm:$0xff]
        %v213 = vld [vmem:[%s183 + $0x8] sm:$0xff]
        %v214 = vld [vmem:[%s183 + $0x10] sm:$0xff]
        %v215 = vld [vmem:[%s183 + $0x18] sm:$0xff]
        %v216 = vld [vmem:[%s183 + $0x20] sm:$0xff]
        %v217 = vld [vmem:[%s183 + $0x28] sm:$0xff]
        %v218 = vld [vmem:[%s183 + $0x30] sm:$0xff]
        %v219 = vld [vmem:[%s183 + $0x38] sm:$0xff]
        %v220 = vld [vmem:[%s183 + $0x40] sm:$0xff]
        %v221 = vld [vmem:[%s183 + $0x48] sm:$0xff]
        %v222 = vld [vmem:[%s183 + $0x50] sm:$0xff]
        %v223 = vld [vmem:[%s183 + $0x58] sm:$0xff]
        %v224 = vld [vmem:[%s183 + $0x60] sm:$0xff]
        %v225 = vld [vmem:[%s183 + $0x68] sm:$0xff]
        %v226 = vld [vmem:[%s183 + $0x70] sm:$0xff]
        %v227 = vld [vmem:[%s183 + $0x78] sm:$0xff]
        %v228 = vld [vmem:[%s183 + $0x80] sm:$0xff]
        %v229 = vld [vmem:[%s183 + $0x88] sm:$0xff]
        %v230 = vld [vmem:[%s183 + $0x90] sm:$0xff]
        %v231 = vld [vmem:[%s183 + $0x98] sm:$0xff]
        %v232 = vld [vmem:[%s183 + $0xa0] sm:$0xff]
        %v233 = vld [vmem:[%s183 + $0xa8] sm:$0xff]
        %v234 = vld [vmem:[%s183 + $0xb0] sm:$0xff]
        %v235 = vld [vmem:[%s183 + $0xb8] sm:$0xff]
        %v236 = vld [vmem:[%s183 + $0xc0] sm:$0xff]
        %v237 = vld [vmem:[%s183 + $0xc8] sm:$0xff]
        %v238 = vld [vmem:[%s183 + $0xd0] sm:$0xff]
        %v239 = vld [vmem:[%s183 + $0xd8] sm:$0xff]
        %v240 = vld [vmem:[%s183 + $0xe0] sm:$0xff]
        %v241 = vld [vmem:[%s183 + $0xe8] sm:$0xff]
        %v242 = vld [vmem:[%s183 + $0xf0] sm:$0xff]
        %v243 = vld [vmem:[%s183 + $0xf8] sm:$0xff]
        %v244 = vadd.f32 %v212, %v213
        %v245 = vadd.f32 %v244, %v214
        %v246 = vadd.f32 %v245, %v215
        %v247 = vadd.f32 %v246, %v216
        %v248 = vadd.f32 %v247, %v217
        %v249 = vadd.f32 %v248, %v218
        %v250 = vadd.f32 %v249, %v219
        %v251 = vadd.f32 %v250, %v220
        %v252 = vadd.f32 %v251, %v221
        %v253 = vadd.f32 %v252, %v222
        %v254 = vadd.f32 %v253, %v223
        %v255 = vadd.f32 %v254, %v224
        %v256 = vadd.f32 %v255, %v225
        %v257 = vadd.f32 %v256, %v226
        %v258 = vadd.f32 %v257, %v227
        %v259 = vadd.f32 %v258, %v228
        %v260 = vadd.f32 %v259, %v229
        %v261 = vadd.f32 %v260, %v230
        %v262 = vadd.f32 %v261, %v231
        %v263 = vadd.f32 %v262, %v232
        %v264 = vadd.f32 %v263, %v233
        %v265 = vadd.f32 %v264, %v234
        %v266 = vadd.f32 %v265, %v235
        %v267 = vadd.f32 %v266, %v236
        %v268 = vadd.f32 %v267, %v237
        %v269 = vadd.f32 %v268, %v238
        %v270 = vadd.f32 %v269, %v239
        %v271 = vadd.f32 %v270, %v240
        %v272 = vadd.f32 %v271, %v241
        %v273 = vadd.f32 %v272, %v242
        %v274 = vadd.f32 %v273, %v243
        %v275 = vrot.slane %v274, 4
        %v276 = vadd.f32 %v274, %v275
        %v277 = vrot.slane %v276, 2
        %v278 = vadd.f32 %v276, %v277
        %v279 = vrot.slane %v278, 1
        %v280 = vadd.f32 %v278, %v279
        %v281 = vadd.f32 %v211, %v280
        %282 = vst [vmem:[#allocation2] sm:$0x1] %v281
        // Predicated region
        $region41: #{tpu_custom_call.1} parent=31 // pred_check
          %p283 = pneg %p206
        $region42: #{tpu_custom_call.1} parent=31 // pred_check_branch
          %285 = sbr.rel (%p283) target = $region44
        $region43: #{tpu_custom_call.1} parent=31 // pred_region
          %v286 = vld [vmem:[#allocation2] sm:$0x1]
          %v287 = vmul.f32 %v286, 0.00390625
          %v288 = vld [vmem:[%s1] sm:$0xff]
          %v289 = vld [vmem:[%s1 + $0x8] sm:$0xff]
          %v290 = vld [vmem:[%s1 + $0x10] sm:$0xff]
          %v291 = vld [vmem:[%s1 + $0x18] sm:$0xff]
          %v292 = vld [vmem:[%s1 + $0x20] sm:$0xff]
          %v293 = vld [vmem:[%s1 + $0x28] sm:$0xff]
          %v294 = vld [vmem:[%s1 + $0x30] sm:$0xff]
          %v295 = vld [vmem:[%s1 + $0x38] sm:$0xff]
          %v296 = vld [vmem:[%s1 + $0x40] sm:$0xff]
          %v297 = vld [vmem:[%s1 + $0x48] sm:$0xff]
          %v298 = vld [vmem:[%s1 + $0x50] sm:$0xff]
          %v299 = vld [vmem:[%s1 + $0x58] sm:$0xff]
          %v300 = vld [vmem:[%s1 + $0x60] sm:$0xff]
          %v301 = vld [vmem:[%s1 + $0x68] sm:$0xff]
          %v302 = vld [vmem:[%s1 + $0x70] sm:$0xff]
          %v303 = vld [vmem:[%s1 + $0x78] sm:$0xff]
          %304 = vmatprep.subr.mxu0 0.0
          %305 = vmatpush1.msra.mxu0 %v288
          %306 = vmatprep.subr.mxu0 0.0
          %307 = vmatpush1.msra.mxu0 %v289
          %308 = vmatprep.subr.mxu0 0.0
          %309 = vmatpush1.msra.mxu0 %v290
          %310 = vmatprep.subr.mxu0 0.0
          %311 = vmatpush1.msra.mxu0 %v291
          %312 = vmatprep.subr.mxu0 0.0
          %313 = vmatpush1.msra.mxu0 %v292
          %314 = vmatprep.subr.mxu0 0.0
          %315 = vmatpush1.msra.mxu0 %v293
          %316 = vmatprep.subr.mxu0 0.0
          %317 = vmatpush1.msra.mxu0 %v294
          %318 = vmatprep.subr.mxu0 0.0
          %319 = vmatpush1.msra.mxu0 %v295
          %320 = vmatprep.subr.mxu0 0.0
          %321 = vmatpush1.msra.mxu0 %v296
          %322 = vmatprep.subr.mxu0 0.0
          %323 = vmatpush1.msra.mxu0 %v297
          %324 = vmatprep.subr.mxu0 0.0
          %325 = vmatpush1.msra.mxu0 %v298
          %326 = vmatprep.subr.mxu0 0.0
          %327 = vmatpush1.msra.mxu0 %v299
          %328 = vmatprep.subr.mxu0 0.0
          %329 = vmatpush1.msra.mxu0 %v300
          %330 = vmatprep.subr.mxu0 0.0
          %331 = vmatpush1.msra.mxu0 %v301
          %332 = vmatprep.subr.mxu0 0.0
          %333 = vmatpush1.msra.mxu0 %v302
          %334 = vmatprep.subr.mxu0 0.0
          %335 = vmatpush1.msra.mxu0 %v303
          %336 = vmatprep.subr.mxu0 0.0
          %337 = vmatpush1.msra.mxu0 0.0
          %338 = vmatprep.subr.mxu0 0.0
          %339 = vmatpush1.msra.mxu0 0.0
          %340 = vmatprep.subr.mxu0 0.0
          %341 = vmatpush1.msra.mxu0 0.0
          %342 = vmatprep.subr.mxu0 0.0
          %343 = vmatpush1.msra.mxu0 0.0
          %344 = vmatprep.subr.mxu0 0.0
          %345 = vmatpush1.msra.mxu0 0.0
          %346 = vmatprep.subr.mxu0 0.0
          %347 = vmatpush1.msra.mxu0 0.0
          %348 = vmatprep.subr.mxu0 0.0
          %349 = vmatpush1.msra.mxu0 0.0
          %350 = vmatprep.subr.mxu0 0.0
          %351 = vmatpush1.msra.mxu0 0.0
          %352 = vmatprep.subr.mxu0 0.0
          %353 = vmatpush1.msra.mxu0 0.0
          %354 = vmatprep.subr.mxu0 0.0
          %355 = vmatpush1.msra.mxu0 0.0
          %356 = vmatprep.subr.mxu0 0.0
          %357 = vmatpush1.msra.mxu0 0.0
          %358 = vmatprep.subr.mxu0 0.0
          %359 = vmatpush1.msra.mxu0 0.0
          %360 = vmatprep.subr.mxu0 0.0
          %361 = vmatpush1.msra.mxu0 0.0
          %362 = vmatprep.subr.mxu0 0.0
          %363 = vmatpush1.msra.mxu0 0.0
          %364 = vmatprep.subr.mxu0 0.0
          %365 = vmatpush1.msra.mxu0 0.0
          %366 = vmatprep.subr.mxu0 0.0
          %367 = vmatpush1.msra.mxu0 0.0
          %368 = vmatprep.mubr.f32.mxu0 0.0
          %369 = vmatmul.mubr.f32.gmra.mrb[0].mxu0 %v287
          %v370 = vpop.f32.mrb[0].mxu0
          %v371 = vadd.f32 0.0, %v370
          %v372 = vpop.f32.mrb[0].mxu0
          %373 = vdwg.mxu0
          %v374 = vmax.f32 %v371, 0.0
          %v375 = vld [vmem:[%s2] sm:$0xff]
          %vm376 = vcmask 64512
          %v378 = vsel %vm376, %v374, 0
          %380 = vmatprep.subr.mxu0 0.0
          %381 = vmatpush1.msra.mxu0 %v375
          %382 = vmatprep.subr.mxu0 0.0
          %383 = vmatpush1.msra.mxu0 0.0
          %384 = vmatprep.subr.mxu0 0.0
          %385 = vmatpush1.msra.mxu0 0.0
          %386 = vmatprep.subr.mxu0 0.0
          %387 = vmatpush1.msra.mxu0 0.0
          %388 = vmatprep.subr.mxu0 0.0
          %389 = vmatpush1.msra.mxu0 0.0
          %390 = vmatprep.subr.mxu0 0.0
          %391 = vmatpush1.msra.mxu0 0.0
          %392 = vmatprep.subr.mxu0 0.0
          %393 = vmatpush1.msra.mxu0 0.0
          %394 = vmatprep.subr.mxu0 0.0
          %395 = vmatpush1.msra.mxu0 0.0
          %396 = vmatprep.subr.mxu0 0.0
          %397 = vmatpush1.msra.mxu0 0.0
          %398 = vmatprep.subr.mxu0 0.0
          %399 = vmatpush1.msra.mxu0 0.0
          %400 = vmatprep.subr.mxu0 0.0
          %401 = vmatpush1.msra.mxu0 0.0
          %402 = vmatprep.subr.mxu0 0.0
          %403 = vmatpush1.msra.mxu0 0.0
          %404 = vmatprep.subr.mxu0 0.0
          %405 = vmatpush1.msra.mxu0 0.0
          %406 = vmatprep.subr.mxu0 0.0
          %407 = vmatpush1.msra.mxu0 0.0
          %408 = vmatprep.subr.mxu0 0.0
          %409 = vmatpush1.msra.mxu0 0.0
          %410 = vmatprep.subr.mxu0 0.0
          %411 = vmatpush1.msra.mxu0 0.0
          %412 = vmatprep.subr.mxu0 0.0
          %413 = vmatpush1.msra.mxu0 0.0
          %414 = vmatprep.subr.mxu0 0.0
          %415 = vmatpush1.msra.mxu0 0.0
          %416 = vmatprep.subr.mxu0 0.0
          %417 = vmatpush1.msra.mxu0 0.0
          %418 = vmatprep.subr.mxu0 0.0
          %419 = vmatpush1.msra.mxu0 0.0
          %420 = vmatprep.subr.mxu0 0.0
          %421 = vmatpush1.msra.mxu0 0.0
          %422 = vmatprep.subr.mxu0 0.0
          %423 = vmatpush1.msra.mxu0 0.0
          %424 = vmatprep.subr.mxu0 0.0
          %425 = vmatpush1.msra.mxu0 0.0
          %426 = vmatprep.subr.mxu0 0.0
          %427 = vmatpush1.msra.mxu0 0.0
          %428 = vmatprep.subr.mxu0 0.0
          %429 = vmatpush1.msra.mxu0 0.0
          %430 = vmatprep.subr.mxu0 0.0
          %431 = vmatpush1.msra.mxu0 0.0
          %432 = vmatprep.subr.mxu0 0.0
          %433 = vmatpush1.msra.mxu0 0.0
          %434 = vmatprep.subr.mxu0 0.0
          %435 = vmatpush1.msra.mxu0 0.0
          %436 = vmatprep.subr.mxu0 0.0
          %437 = vmatpush1.msra.mxu0 0.0
          %438 = vmatprep.subr.mxu0 0.0
          %439 = vmatpush1.msra.mxu0 0.0
          %440 = vmatprep.subr.mxu0 0.0
          %441 = vmatpush1.msra.mxu0 0.0
          %442 = vmatprep.subr.mxu0 0.0
          %443 = vmatpush1.msra.mxu0 0.0
          %444 = vmatprep.mubr.f32.mxu0 0.0
          %445 = vmatmul.mubr.f32.gmra.mrb[0].mxu0 %v378
          %v446 = vpop.f32.mrb[0].mxu0
          %v447 = vadd.f32 0.0, %v446
          %v448 = vpop.f32.mrb[0].mxu0
          %449 = vdwg.mxu0
          %v450 = vxor.u32 %v447, 2147483648
          %v451 = vmul.f32 %v450, 1.442695
          %v452 = vpow.pop %v451
          %v453 = vadd.f32 %v452, 1.0
          %v454 = vrcp.pop %v453
          %v455 = vmul.f32 1.0, %v454
          %456 = vst [vmem:[%s204] sm:$0x1] %v455
        $region44: #{tpu_custom_call.1} parent=31 // pred_fallthru
          _
        %s457 = sand.u32 %s110, 1
        %s458 = scalar_lea.sflag [#allocation5], %s457
        %s459 = sand.u32 %s110, 1
        %s460 = scalar_lea.vmem [#allocation6], %s459
        // Predicated region
        $region45: #{tpu_custom_call.1} parent=31 // pred_check
          %p461 = pneg %p120
        $region46: #{tpu_custom_call.1} parent=31 // pred_check_branch
          %463 = sbr.rel (%p461) target = $region48
        $region47: #{tpu_custom_call.1} parent=31 // pred_region
          %s465 = ssub.s32 16, 16
          %466 = vsyncadd %s458, %s465
          %s467 = smul.addr %s24, 16
          %s468 = scalar_lea.hbm %s3, %s467
          %s470 = sshll.u32 %s460, 4
          %s471 = int_to_ptr.vmem [resolvable:$true] %s470
          %473 = dma.vmem_to_hbm [thread:$0]  %s471, 16, %s468, %s458
        $region48: #{tpu_custom_call.1} parent=31 // pred_fallthru
          _
      $region32: #{tpu_custom_call.1} parent=5 // pred_fallthru
        _
      %p474 = scmp.le.s32.totalorder 2, %s15
      // Predicated region
      $region49: #{tpu_custom_call.1} parent=5 // pred_check
        %p475 = pneg %p474
      $region50: #{tpu_custom_call.1} parent=5 // pred_check_branch
        %477 = sbr.rel (%p475) target = $region52
      $region51: #{tpu_custom_call.1} parent=5 // pred_region
        %s478 = ssub.s32 %s15, 2
        // Predicated region
        $region53: #{tpu_custom_call.1} parent=51 // pred_check
          %p479 = pneg %p126
        $region54: #{tpu_custom_call.1} parent=51 // pred_check_branch
          %481 = sbr.rel (%p479) target = $region56
        $region55: #{tpu_custom_call.1} parent=51 // pred_region
          %s482 = sand.u32 %s111, 1
          %s483 = scalar_lea.sflag [#allocation5], %s482
          %s484 = sand.u32 %s111, 1
          %s485 = scalar_lea.vmem [#allocation6], %s484
          %486 = dma.done %s483, 16
        $region56: #{tpu_custom_call.1} parent=51 // pred_fallthru
          _
      $region52: #{tpu_custom_call.1} parent=5 // pred_fallthru
        _
    $region6: #{tpu_custom_call.1} parent=1 // loop_footer
      %s19 = sadd.s32 1, %s15
    $region7: #{tpu_custom_call.1} parent=1 // loop_footer_branch
      %14 = sbr.rel target = $region3
    $region8: #{tpu_custom_call.1} parent=1 // loop_exit
      _
    %487 = vsyncpa [#allocation4], 1
    %s488 = scalar_lea.sflag [#allocation4], 1
    %489 = vsyncpa %s488, 1
    %490 = vsyncpa [#allocation5], 1
    %s491 = scalar_lea.sflag [#allocation5], 1
    %492 = vsyncpa %s491, 1

</llo_original>
